<compile_context>
chip_gen: v7x
topology: tpu7x:2x2x1
jax: 0.10.0
libtpu: 0.0.40
codegen_flags: <defaults>
</compile_context>

<pallas_src>
import functools
import math

import numpy as np
import jax
import jax.numpy as jnp
from jax.experimental import pallas as pl
from jax.experimental.pallas import tpu as pltpu


# ---------------------------------------------------------------------------
# LoG kernel construction (mirrors get_log_kernel2d in the reference code)
# ---------------------------------------------------------------------------
def get_log_kernel(kernel_size: int = 15, sigma: float = 2.5) -> np.ndarray:
    sigmas = [float(sigma)] * 2
    sizes = [int(kernel_size)] * 2
    coords = [np.arange(-s // 2 + 1, s // 2 + 1, dtype=np.float64) for s in sizes]
    gx, gy = np.meshgrid(coords[0], coords[1], indexing="ij")
    gauss = np.exp(-(gx ** 2) / (2.0 * sigmas[0] ** 2)) * np.exp(
        -(gy ** 2) / (2.0 * sigmas[1] ** 2)
    )
    final = (
        gauss
        * ((gx ** 2 + gy ** 2) - 2.0 * sigmas[0] * sigmas[1])
        * (1.0 / ((2.0 * math.pi) * (sigmas[0] ** 2) * (sigmas[1] ** 2)))
    )
    final = -final / np.sum(final)
    return final  # float64; cast where consumed


# ---------------------------------------------------------------------------
# Separable (rank-2) LoG as banded Toeplitz matmuls, zero-padded to (Hp, Wp).
#   conv2d_same(X)[0:H,0:W] == (sum_r Ma[r] @ Xp @ Tw[r])[0:H,0:W]
# and the padded rows/cols of the result are exactly zero.
# ---------------------------------------------------------------------------
def _banded_toeplitz(taps: np.ndarray, size: int) -> np.ndarray:
    """T[q, j] = taps[q - j + pad] inside the band, 0 outside.  Shape (size, size)."""
    k = taps.shape[0]
    pad = k // 2
    q = np.arange(size)[:, None]
    j = np.arange(size)[None, :]
    idx = q - j + pad
    valid = (idx >= 0) & (idx < k)
    return np.where(valid, taps[np.clip(idx, 0, k - 1)], 0.0)


def _separable_log_matrices(kernel_size, sigma, h, w, hp, wp):
    k2d = get_log_kernel(kernel_size, sigma)              # (ks, ks) float64
    u, s, vt = np.linalg.svd(k2d)
    rank = max(1, int(np.sum(s > s[0] * 1e-9)))           # == 2 for the LoG
    ma = np.zeros((rank, hp, hp), np.float64)
    twc = np.zeros((wp, rank * wp), np.float64)           # [Tw_0 | Tw_1 | ...] fused
    for r in range(rank):
        a = u[:, r] * np.sqrt(s[r])                       # taps along H (rows)
        b = vt[r, :] * np.sqrt(s[r])                      # taps along W (cols)
        ma[r, :h, :h] = _banded_toeplitz(a, h).T          # left-multiply form  (H,H)
        twc[:w, r * wp:r * wp + w] = _banded_toeplitz(b, w)  # right-multiply (W,W)
    return ma, twc, rank


# ---------------------------------------------------------------------------
# Sizing helpers (generation-aware VMEM budget, plane-block chooser)
# ---------------------------------------------------------------------------
def _round_up(x: int, m: int) -> int:
    return ((x + m - 1) // m) * m


def _vmem_capacity_bytes() -> int:
    try:
        cap = getattr(pltpu.get_tpu_info(), "vmem_capacity_bytes", None)
        if cap:
            return int(cap)
    except Exception:
        pass
    return 128 * 1024 * 1024          # v5e/v6e; v7x reports 64 MiB itself


def _choose_plane_block(nc, hp, wp, rank, in_itemsize, vmem_limit, max_unroll=16):
    """Largest divisor of nc that fits the VMEM budget, accounting for input
    double-buffering, the resident (double-buffered) Toeplitz factors and the
    in-kernel temporaries; capped so the grid keeps >= 2 'parallel' steps
    (v7x megacore) and the H-pass static unroll stays short (v5e vst pressure)."""
    const_bytes = 2 * (rank * hp * hp + wp * rank * wp) * 2   # bf16, 2 pipeline bufs
    budget = int(vmem_limit * 0.7) - const_bytes
    per_plane = (
        2 * 2 * hp * wp * in_itemsize        # img1/img2 blocks, double-buffered
        + hp * wp * 2                        # bf16 diff
        + hp * rank * wp * (4 + 2)           # W-pass result (f32) + bf16 copy
    )
    cap = max(1, min(nc, budget // max(per_plane, 1), max_unroll))
    if nc > 1:
        cap = min(cap, max(1, nc // 2))      # guarantee g >= 2 (both v7x TCs busy)
    return max(d for d in range(1, int(cap) + 1) if nc % d == 0)


# ---------------------------------------------------------------------------
# Pallas kernel: one block of folded N*C planes per grid step.
# Emits per-block partial sums:  sum|LoG(img1-img2)|  (and sum(img2^2) if norm).
# ---------------------------------------------------------------------------
def _hfen_block_kernel(img1_ref, img2_ref, ma_ref, twc_ref, l1_ref, sq_ref=None,
                       *, norm):
    planes, hp, wp = img1_ref.shape
    rank = ma_ref.shape[0]

    x2 = img2_ref[...].astype(jnp.float32)
    diff = (img1_ref[...].astype(jnp.float32) - x2).astype(jnp.bfloat16)
    d2 = diff.reshape(planes * hp, wp)               # free reshape: hp % 16 == 0

    # W-pass: ONE fused bf16 MXU matmul over all planes and both separable ranks.
    y = jnp.dot(d2, twc_ref[...], preferred_element_type=jnp.float32)
    y = y.astype(jnp.bfloat16)                       # (planes*hp, rank*wp)

    ma_mats = [ma_ref[r] for r in range(rank)]       # bf16 (hp, hp), hoisted

    # H-pass: per plane (contraction is over the sublane axis); per-iteration
    # live set is a single (hp, wp) f32 tile.
    abs_acc = jnp.zeros((hp, wp), jnp.float32)
    for b in range(planes):
        yb = y[b * hp:(b + 1) * hp, :]
        z = jnp.dot(ma_mats[0], yb[:, :wp], preferred_element_type=jnp.float32)
        for r in range(1, rank):
            z = z + jnp.dot(ma_mats[r], yb[:, r * wp:(r + 1) * wp],
                            preferred_element_type=jnp.float32)
        abs_acc = abs_acc + jnp.abs(z)

    l1_ref[...] = jnp.zeros(l1_ref.shape, jnp.float32) + jnp.sum(abs_acc)
    if norm:
        sq_ref[...] = jnp.zeros(sq_ref.shape, jnp.float32) + jnp.sum(x2 * x2)


# ---------------------------------------------------------------------------
# Wrapper
# ---------------------------------------------------------------------------
def hfen_loss(img1, img2, *, kernel_size: int = 15, sigma: float = 2.5,
              norm: bool = False, block_planes=None):
    """HFEN loss between img1 (prediction) and img2 (target), NCHW inputs.
    criterion = L1 mean (canonical choice; the torch default loss_f=None crashes)."""
    assert img1.shape == img2.shape and img1.ndim == 4
    n, c, h, w = img1.shape
    nc = n * c
    hp = _round_up(h, 16)        # sublane (+ bf16 packing) alignment
    wp = _round_up(w, 128)       # lane alignment -> unmasked, lane-dense operands

    ma_np, twc_np, rank = _separable_log_matrices(kernel_size, sigma, h, w, hp, wp)
    ma = jnp.asarray(ma_np, dtype=jnp.bfloat16)
    twc = jnp.asarray(twc_np, dtype=jnp.bfloat16)

    # Fold N,C into a plane axis (metadata-only) and zero-pad the spatial dims.
    x1 = img1.reshape(nc, h, w)
    x2 = img2.reshape(nc, h, w)
    if (hp, wp) != (h, w):
        pad = ((0, 0), (0, hp - h), (0, wp - w))
        x1 = jnp.pad(x1, pad)
        x2 = jnp.pad(x2, pad)

    vmem_cap = _vmem_capacity_bytes()                       # 64 MiB on v7x
    vmem_limit = int(min(vmem_cap * 3 // 4, 112 * 1024 * 1024))
    in_itemsize = jnp.dtype(x1.dtype).itemsize

    tb = (block_planes if block_planes is not None
          else _choose_plane_block(nc, hp, wp, rank, in_itemsize, vmem_limit))
    assert nc % tb == 0, "block_planes must divide N*C"
    g = nc // tb

    kernel_fn = functools.partial(_hfen_block_kernel, norm=norm)

    n_out = 2 if norm else 1     # drop the ||img2||^2 output when norm=False
    out_specs = [pl.BlockSpec((1, 1, 128), lambda i: (i, 0, 0)) for _ in range(n_out)]
    out_shape = [jax.ShapeDtypeStruct((g, 1, 128), jnp.float32) for _ in range(n_out)]

    flops = int(nc * (2 * hp * wp * rank * wp            # W-pass
                      + rank * 2 * hp * hp * wp          # H-pass
                      + 6 * hp * wp))                    # diff / abs / sums
    bytes_accessed = int(2 * nc * hp * wp * in_itemsize
                         + (rank * hp * hp + wp * rank * wp) * 2
                         + g * n_out * 128 * 4)

    outs = pl.pallas_call(
        kernel_fn,
        grid=(g,),
        in_specs=[
            pl.BlockSpec((tb, hp, wp), lambda i: (i, 0, 0)),    # img1 planes
            pl.BlockSpec((tb, hp, wp), lambda i: (i, 0, 0)),    # img2 planes
            # Grid-invariant Toeplitz factors (fetched once; their two default
            # pipeline buffers are accounted for in the VMEM budget above).
            pl.BlockSpec((rank, hp, hp), lambda i: (0, 0, 0)),
            pl.BlockSpec((wp, rank * wp), lambda i: (0, 0)),
        ],
        out_specs=out_specs,
        out_shape=out_shape,
        compiler_params=pltpu.CompilerParams(
            dimension_semantics=("parallel",),
            vmem_limit_bytes=vmem_limit,
        ),
        cost_estimate=pl.CostEstimate(
            flops=flops, transcendentals=0, bytes_accessed=bytes_accessed),
    )(x1, x2, ma, twc)

    # Tiny epilogue: hierarchical reduction of the per-block partial sums.
    loss = jnp.sum(outs[0][:, 0, 0]) / float(nc * h * w)    # criterion = L1 mean
    if norm:
        loss = loss / jnp.sqrt(jnp.sum(outs[1][:, 0, 0]))   # / ||img2||_F
    return loss


# ---------------------------------------------------------------------------
# Pure-JAX reference (direct depthwise 15x15 conv) for a correctness check.
# ---------------------------------------------------------------------------
def hfen_loss_reference(img1, img2, *, kernel_size=15, sigma=2.5, norm=False):
    n, c, h, w = img1.shape
    pad = kernel_size // 2
    k2d = jnp.asarray(get_log_kernel(kernel_size, sigma), jnp.float32)
    filt = k2d.reshape(1, 1, kernel_size, kernel_size)
    x1 = img1.reshape(n * c, 1, h, w).astype(jnp.float32)
    x2 = img2.reshape(n * c, 1, h, w).astype(jnp.float32)

    def conv(x):
        return jax.lax.conv_general_dilated(
            x, filt, (1, 1), ((pad, pad), (pad, pad)),
            dimension_numbers=("NCHW", "OIHW", "NCHW"),
            precision=jax.lax.Precision.HIGHEST)

    loss = jnp.mean(jnp.abs(conv(x1) - conv(x2)))
    if norm:
        loss = loss / jnp.linalg.norm(img2)
    return loss


if __name__ == "__main__":
    # Small shapes consistent with the module (the default filter is built for
    # 3 channels in load_filter: in=out=groups=3).
    key = jax.random.PRNGKey(0)
    k1, k2 = jax.random.split(key)
    img1 = jax.random.normal(k1, (2, 3, 16, 16), dtype=jnp.float32)
    img2 = jax.random.normal(k2, (2, 3, 16, 16), dtype=jnp.float32)

    for norm in (False, True):
        got = jax.block_until_ready(hfen_loss(img1, img2, norm=norm))
        want = jax.block_until_ready(hfen_loss_reference(img1, img2, norm=norm))
        # bf16 MXU operands with f32 accumulation: scalar agrees to well under 3%.
        np.testing.assert_allclose(float(got), float(want), rtol=3e-2, atol=1e-4)

    print("KERNEL_OK")
</pallas_src>

<mosaic_0001>
module attributes {stable_mosaic.version = 11 : i64} {
  func.func @_hfen_block_kernel(%arg0: i32, %arg1: memref<3x16x128xf32, #tpu.memory_space<vmem>>, %arg2: memref<3x16x128xf32, #tpu.memory_space<vmem>>, %arg3: memref<2x16x16xbf16, #tpu.memory_space<vmem>>, %arg4: memref<128x256xbf16, #tpu.memory_space<vmem>>, %arg5: memref<1x1x128xf32, #tpu.memory_space<vmem>>) attributes {dimension_semantics = [#tpu.dimension_semantics<parallel>], iteration_bounds = array<i64: 2>, scalar_prefetch = 0 : i64, scratch_operands = 0 : i64, tpu.core_type = #tpu.core_type<tc>, window_params = [{transform_indices = @transform_0, window_bounds = array<i64: 3, 16, 128>}, {transform_indices = @transform_1, window_bounds = array<i64: 3, 16, 128>}, {pipeline_mode = #tpu.pipeline_mode<synchronous>, transform_indices = @transform_2, window_bounds = array<i64: 2, 16, 16>}, {pipeline_mode = #tpu.pipeline_mode<synchronous>, transform_indices = @transform_3, window_bounds = array<i64: 128, 256>}, {transform_indices = @transform_4, window_bounds = array<i64: 1, 1, 128>}]} {
    %c0 = arith.constant 0 : index
    %c0_0 = arith.constant 0 : index
    %c0_1 = arith.constant 0 : index
    %0 = vector.load %arg2[%c0, %c0_0, %c0_1] : memref<3x16x128xf32, #tpu.memory_space<vmem>>, vector<3x16x128xf32>
    %c0_2 = arith.constant 0 : index
    %c0_3 = arith.constant 0 : index
    %c0_4 = arith.constant 0 : index
    %1 = vector.load %arg1[%c0_2, %c0_3, %c0_4] : memref<3x16x128xf32, #tpu.memory_space<vmem>>, vector<3x16x128xf32>
    %2 = arith.subf %1, %0 : vector<3x16x128xf32>
    %3 = arith.truncf %2 : vector<3x16x128xf32> to vector<3x16x128xbf16>
    %4 = vector.shape_cast %3 : vector<3x16x128xbf16> to vector<48x128xbf16>
    %c0_5 = arith.constant 0 : index
    %c0_6 = arith.constant 0 : index
    %5 = vector.load %arg4[%c0_5, %c0_6] : memref<128x256xbf16, #tpu.memory_space<vmem>>, vector<128x256xbf16>
    %cst = arith.constant dense<0.000000e+00> : vector<48x256xf32>
    %6 = tpu.matmul %4, %5, %cst {dimension_numbers = #tpu.dot_dimension_numbers<[1], [0], [0], [1], [0, 0, 1, 1], [], []>} : vector<48x128xbf16>, vector<128x256xbf16>, vector<48x256xf32> -> vector<48x256xf32>
    %7 = arith.truncf %6 : vector<48x256xf32> to vector<48x256xbf16>
    %c0_7 = arith.constant 0 : index
    %c0_8 = arith.constant 0 : index
    %c0_9 = arith.constant 0 : index
    %8 = vector.load %arg3[%c0_7, %c0_8, %c0_9] : memref<2x16x16xbf16, #tpu.memory_space<vmem>>, vector<1x16x16xbf16>
    %9 = vector.shape_cast %8 : vector<1x16x16xbf16> to vector<16x16xbf16>
    %c1 = arith.constant 1 : index
    %c0_10 = arith.constant 0 : index
    %c0_11 = arith.constant 0 : index
    %10 = vector.load %arg3[%c1, %c0_10, %c0_11] : memref<2x16x16xbf16, #tpu.memory_space<vmem>>, vector<1x16x16xbf16>
    %11 = vector.shape_cast %10 : vector<1x16x16xbf16> to vector<16x16xbf16>
    %cst_12 = arith.constant 0.000000e+00 : f32
    %12 = vector.broadcast %cst_12 : f32 to vector<16x128xf32>
    %13 = vector.extract_strided_slice %7 {offsets = [0, 0], sizes = [16, 256], strides = [1, 1]} : vector<48x256xbf16> to vector<16x256xbf16>
    %14 = vector.extract_strided_slice %13 {offsets = [0, 0], sizes = [16, 128], strides = [1, 1]} : vector<16x256xbf16> to vector<16x128xbf16>
    %cst_13 = arith.constant dense<0.000000e+00> : vector<16x128xf32>
    %15 = tpu.matmul %9, %14, %cst_13 {dimension_numbers = #tpu.dot_dimension_numbers<[1], [0], [0], [1], [0, 0, 1, 1], [], []>} : vector<16x16xbf16>, vector<16x128xbf16>, vector<16x128xf32> -> vector<16x128xf32>
    %16 = vector.extract_strided_slice %13 {offsets = [0, 128], sizes = [16, 128], strides = [1, 1]} : vector<16x256xbf16> to vector<16x128xbf16>
    %cst_14 = arith.constant dense<0.000000e+00> : vector<16x128xf32>
    %17 = tpu.matmul %11, %16, %cst_14 {dimension_numbers = #tpu.dot_dimension_numbers<[1], [0], [0], [1], [0, 0, 1, 1], [], []>} : vector<16x16xbf16>, vector<16x128xbf16>, vector<16x128xf32> -> vector<16x128xf32>
    %18 = arith.addf %15, %17 : vector<16x128xf32>
    %19 = math.absf %18 : vector<16x128xf32>
    %20 = arith.addf %12, %19 : vector<16x128xf32>
    %21 = vector.extract_strided_slice %7 {offsets = [16, 0], sizes = [16, 256], strides = [1, 1]} : vector<48x256xbf16> to vector<16x256xbf16>
    %22 = vector.extract_strided_slice %21 {offsets = [0, 0], sizes = [16, 128], strides = [1, 1]} : vector<16x256xbf16> to vector<16x128xbf16>
    %cst_15 = arith.constant dense<0.000000e+00> : vector<16x128xf32>
    %23 = tpu.matmul %9, %22, %cst_15 {dimension_numbers = #tpu.dot_dimension_numbers<[1], [0], [0], [1], [0, 0, 1, 1], [], []>} : vector<16x16xbf16>, vector<16x128xbf16>, vector<16x128xf32> -> vector<16x128xf32>
    %24 = vector.extract_strided_slice %21 {offsets = [0, 128], sizes = [16, 128], strides = [1, 1]} : vector<16x256xbf16> to vector<16x128xbf16>
    %cst_16 = arith.constant dense<0.000000e+00> : vector<16x128xf32>
    %25 = tpu.matmul %11, %24, %cst_16 {dimension_numbers = #tpu.dot_dimension_numbers<[1], [0], [0], [1], [0, 0, 1, 1], [], []>} : vector<16x16xbf16>, vector<16x128xbf16>, vector<16x128xf32> -> vector<16x128xf32>
    %26 = arith.addf %23, %25 : vector<16x128xf32>
    %27 = math.absf %26 : vector<16x128xf32>
    %28 = arith.addf %20, %27 : vector<16x128xf32>
    %29 = vector.extract_strided_slice %7 {offsets = [32, 0], sizes = [16, 256], strides = [1, 1]} : vector<48x256xbf16> to vector<16x256xbf16>
    %30 = vector.extract_strided_slice %29 {offsets = [0, 0], sizes = [16, 128], strides = [1, 1]} : vector<16x256xbf16> to vector<16x128xbf16>
    %cst_17 = arith.constant dense<0.000000e+00> : vector<16x128xf32>
    %31 = tpu.matmul %9, %30, %cst_17 {dimension_numbers = #tpu.dot_dimension_numbers<[1], [0], [0], [1], [0, 0, 1, 1], [], []>} : vector<16x16xbf16>, vector<16x128xbf16>, vector<16x128xf32> -> vector<16x128xf32>
    %32 = vector.extract_strided_slice %29 {offsets = [0, 128], sizes = [16, 128], strides = [1, 1]} : vector<16x256xbf16> to vector<16x128xbf16>
    %cst_18 = arith.constant dense<0.000000e+00> : vector<16x128xf32>
    %33 = tpu.matmul %11, %32, %cst_18 {dimension_numbers = #tpu.dot_dimension_numbers<[1], [0], [0], [1], [0, 0, 1, 1], [], []>} : vector<16x16xbf16>, vector<16x128xbf16>, vector<16x128xf32> -> vector<16x128xf32>
    %34 = arith.addf %31, %33 : vector<16x128xf32>
    %35 = math.absf %34 : vector<16x128xf32>
    %36 = arith.addf %28, %35 : vector<16x128xf32>
    %cst_19 = arith.constant 0.000000e+00 : f32
    %37 = vector.broadcast %cst_19 : f32 to vector<1x1x128xf32>
    %38 = vector.shape_cast %36 : vector<16x128xf32> to vector<1x16x128xf32>
    %cst_20 = arith.constant dense<0.000000e+00> : vector<1xf32>
    %39 = vector.multi_reduction <add>, %38, %cst_20 [1, 2] : vector<1x16x128xf32> to vector<1xf32>
    %40 = vector.shape_cast %39 : vector<1xf32> to vector<1x1x1xf32>
    %41 = vector.extract %40[0, 0, 0] : f32 from vector<1x1x1xf32>
    %42 = vector.broadcast %41 : f32 to vector<1x1x128xf32>
    %43 = arith.addf %37, %42 : vector<1x1x128xf32>
    %c0_21 = arith.constant 0 : index
    %c0_22 = arith.constant 0 : index
    %c0_23 = arith.constant 0 : index
    %44 = vector.load %arg5[%c0_21, %c0_22, %c0_23] : memref<1x1x128xf32, #tpu.memory_space<vmem>>, vector<1x1x128xf32>
    tpu.vector_store %arg5[%c0_21, %c0_22, %c0_23], %43 {strides = array<i32>} : memref<1x1x128xf32, #tpu.memory_space<vmem>>, vector<1x1x128xf32>,
    return
  }
  func.func @transform_0(%arg0: i32) -> (i32, i32, i32) {
    %c0_i32 = arith.constant 0 : i32
    %c0_i32_0 = arith.constant 0 : i32
    %c0_i32_1 = arith.constant 0 : i32
    return %arg0, %c0_i32, %c0_i32_0 : i32, i32, i32
  }
  func.func @transform_1(%arg0: i32) -> (i32, i32, i32) {
    %c0_i32 = arith.constant 0 : i32
    %c0_i32_0 = arith.constant 0 : i32
    %c0_i32_1 = arith.constant 0 : i32
    return %arg0, %c0_i32, %c0_i32_0 : i32, i32, i32
  }
  func.func @transform_2(%arg0: i32) -> (i32, i32, i32) {
    %c0_i32 = arith.constant 0 : i32
    %c0_i32_0 = arith.constant 0 : i32
    %c0_i32_1 = arith.constant 0 : i32
    %c0_i32_2 = arith.constant 0 : i32
    return %c0_i32, %c0_i32_0, %c0_i32_1 : i32, i32, i32
  }
  func.func @transform_3(%arg0: i32) -> (i32, i32) {
    %c0_i32 = arith.constant 0 : i32
    %c0_i32_0 = arith.constant 0 : i32
    %c0_i32_1 = arith.constant 0 : i32
    return %c0_i32, %c0_i32_0 : i32, i32
  }
  func.func @transform_4(%arg0: i32) -> (i32, i32, i32) {
    %c0_i32 = arith.constant 0 : i32
    %c0_i32_0 = arith.constant 0 : i32
    %c0_i32_1 = arith.constant 0 : i32
    return %arg0, %c0_i32, %c0_i32_0 : i32, i32, i32
  }
}

</mosaic_0001>

<llo_original>
// kernel: tpu_custom_call.1
$region0: #{tpu_custom_call.1}
  #allocation0 [shape = 'u32[]', space=smem, size = 0x4, offset = 0x4, fixed_abs, tag = 'smem constant byte address 0x4 - core index']
  #allocation1 [shape = 'u32[144,128]{1,0:T(1,128)}', space=vmem, size = 0x12000, scoped, tag = 'internal scratch']
  %s0 = inlined_call_operand.hbm [shape: f32[6,16,128], index: 0, kind: input, shape index: {}]
  %s1 = inlined_call_operand.hbm [shape: f32[6,16,128], index: 1, kind: input, shape index: {}]
  %s2 = inlined_call_operand.hbm [shape: bf16[2,16,16], index: 2, kind: input, shape index: {}]
  %s3 = inlined_call_operand.hbm [shape: bf16[128,256], index: 3, kind: input, shape index: {}]
  %s4 = inlined_call_operand.hbm [shape: f32[2,1,128], index: 4, kind: output, shape index: {}]
  %s5 = sld [smem:[#allocation0]]
  $region65: #{tpu_custom_call.1} parent=0
    _
  %s7 = ssub.s32 1, %s5
  %s8 = scalar_select 0, %s7, %s5
  $region1: #{tpu_custom_call.1} parent=0
    #allocation2 [shape = 'u8[49152]{0}', space=vmem, size = 0xc000, scoped, tag = 'input window, operand 0']
    #allocation3 [shape = 's32[2]{0}', space=sflag, size = 0x8, scoped, tag = 'scoped memory for tpu_custom_call.1']
    #allocation4 [shape = 's32[2]{0}', space=sflag, size = 0x8, scoped, tag = 'scoped memory for tpu_custom_call.1']
    #allocation5 [shape = 'u8[49152]{0}', space=vmem, size = 0xc000, scoped, tag = 'input window, operand 1']
    #allocation6 [shape = 's32[2]{0}', space=sflag, size = 0x8, scoped, tag = 'scoped memory for tpu_custom_call.1']
    #allocation7 [shape = 'u8[8192]{0}', space=vmem, size = 0x2000, scoped, tag = 'input window, operand 2, single buffered']
    #allocation8 [shape = 'u8[65536]{0}', space=vmem, size = 0x10000, scoped, tag = 'input window, operand 3, single buffered']
    #allocation9 [shape = 's32[1]{0}', space=sflag, size = 0x4, scoped, tag = 'scoped memory for tpu_custom_call.1']
    #allocation10 [shape = 'u8[1024]{0}', space=vmem, size = 0x400, scoped, tag = 'output window, operand 0']
    %9 = vsyncpa [#allocation3], 0
    %s10 = scalar_lea.sflag [#allocation3], 1
    %11 = vsyncpa %s10, 0
    %12 = vsyncpa [#allocation6], 0
    %s13 = scalar_lea.sflag [#allocation6], 1
    %14 = vsyncpa %s13, 0
    %15 = vsyncpa [#allocation9], 0
    %16 = vsyncpa [#allocation4], 0
    %s17 = scalar_lea.sflag [#allocation4], 1
    %18 = vsyncpa %s17, 0
    loop: start=0, step=1, limit=4
    $region2: #{tpu_custom_call.1} parent=1 // loop_pre_header
      _
    $region3: #{tpu_custom_call.1} parent=1 // loop_header
      %s20 = sphi 0, %s24
      %p21 = scmp.ge.s32.totalorder %s20, 4
      %s30 = sphi 0, %s32
      %s33 = sphi 0, %s30
      %s34 = sphi 0, %s33
      %s50 = sphi 0, %s34
      %s56 = sphi 0, %s58
      %s59 = sphi 0, %s56
      %s60 = sphi 0, %s59
      %s76 = sphi 0, %s60
      %s80 = sphi 0, %s80
      %s82 = sphi 0, %s80
      %s83 = sphi 0, %s82
      %s97 = sphi 0, %s83
      %s101 = sphi 0, %s101
      %s103 = sphi 0, %s101
      %s104 = sphi 0, %s103
      %s118 = sphi 0, %s104
      %s124 = sphi 0, %s126
      %s127 = sphi 0, %s124
      %s128 = sphi 0, %s127
      %s144 = sphi 0, %s128
    $region4: #{tpu_custom_call.1} parent=1 // loop_header_branch
      %23 = sbr.rel (%p21) target = $region8
    $region5: #{tpu_custom_call.1} parent=1 // loop_body
      %s25 = ssub.s32 %s20, 1
      %s26 = ssub.s32 %s20, 2
      %s27 = sadd.s32 %s20, 1
      %s28 = ssub.s32 %s20, %s27
      %p29 = scmp.eq.s32.totalorder %s28, 0
      %s31 = sadd.s32 %s30, 1
      %s32 = scalar_select %p29, %s30, %s31
      %p35 = pneg %p29
      %p36 = scmp.eq.s32.totalorder %s20, 1
      %p37 = por %p35, %p36
      %p38 = scmp.ne.s32.totalorder %s30, %s33
      %p39 = scmp.eq.s32.totalorder %s20, 0
      %p40 = por %p38, %p39
      %p41 = scmp.ne.s32.totalorder %s30, %s33
      %p42 = scmp.eq.s32.totalorder %s25, 1
      %p43 = por %p41, %p42
      %p44 = scmp.ne.s32.totalorder %s33, %s34
      %p45 = scmp.eq.s32.totalorder %s25, 0
      %p46 = por %p44, %p45
      %p47 = scmp.ne.s32.totalorder %s33, %s34
      %p48 = scmp.eq.s32.totalorder %s26, 1
      %p49 = por %p47, %p48
      %p51 = scmp.ne.s32.totalorder %s34, %s50
      %p52 = scmp.eq.s32.totalorder %s26, 0
      %p53 = por %p51, %p52
      %s54 = ssub.s32 %s20, %s27
      %p55 = scmp.eq.s32.totalorder %s54, 0
      %s57 = sadd.s32 %s56, 1
      %s58 = scalar_select %p55, %s56, %s57
      %p61 = pneg %p55
      %p62 = scmp.eq.s32.totalorder %s20, 1
      %p63 = por %p61, %p62
      %p64 = scmp.ne.s32.totalorder %s56, %s59
      %p65 = scmp.eq.s32.totalorder %s20, 0
      %p66 = por %p64, %p65
      %p67 = scmp.ne.s32.totalorder %s56, %s59
      %p68 = scmp.eq.s32.totalorder %s25, 1
      %p69 = por %p67, %p68
      %p70 = scmp.ne.s32.totalorder %s59, %s60
      %p71 = scmp.eq.s32.totalorder %s25, 0
      %p72 = por %p70, %p71
      %p73 = scmp.ne.s32.totalorder %s59, %s60
      %p74 = scmp.eq.s32.totalorder %s26, 1
      %p75 = por %p73, %p74
      %p77 = scmp.ne.s32.totalorder %s60, %s76
      %p78 = scmp.eq.s32.totalorder %s26, 0
      %p79 = por %p77, %p78
      %s81 = sadd.s32 %s80, 1
      %p84 = scmp.eq.s32.totalorder %s20, 1
      %p85 = scmp.ne.s32.totalorder %s80, %s82
      %p86 = scmp.eq.s32.totalorder %s20, 0
      %p87 = por %p85, %p86
      %p88 = scmp.ne.s32.totalorder %s80, %s82
      %p89 = scmp.eq.s32.totalorder %s25, 1
      %p90 = por %p88, %p89
      %p91 = scmp.ne.s32.totalorder %s82, %s83
      %p92 = scmp.eq.s32.totalorder %s25, 0
      %p93 = por %p91, %p92
      %p94 = scmp.ne.s32.totalorder %s82, %s83
      %p95 = scmp.eq.s32.totalorder %s26, 1
      %p96 = por %p94, %p95
      %p98 = scmp.ne.s32.totalorder %s83, %s97
      %p99 = scmp.eq.s32.totalorder %s26, 0
      %p100 = por %p98, %p99
      %s102 = sadd.s32 %s101, 1
      %p105 = scmp.eq.s32.totalorder %s20, 1
      %p106 = scmp.ne.s32.totalorder %s101, %s103
      %p107 = scmp.eq.s32.totalorder %s20, 0
      %p108 = por %p106, %p107
      %p109 = scmp.ne.s32.totalorder %s101, %s103
      %p110 = scmp.eq.s32.totalorder %s25, 1
      %p111 = por %p109, %p110
      %p112 = scmp.ne.s32.totalorder %s103, %s104
      %p113 = scmp.eq.s32.totalorder %s25, 0
      %p114 = por %p112, %p113
      %p115 = scmp.ne.s32.totalorder %s103, %s104
      %p116 = scmp.eq.s32.totalorder %s26, 1
      %p117 = por %p115, %p116
      %p119 = scmp.ne.s32.totalorder %s104, %s118
      %p120 = scmp.eq.s32.totalorder %s26, 0
      %p121 = por %p119, %p120
      %s122 = ssub.s32 %s20, %s27
      %p123 = scmp.eq.s32.totalorder %s122, 0
      %s125 = sadd.s32 %s124, 1
      %s126 = scalar_select %p123, %s124, %s125
      %p129 = pneg %p123
      %p130 = scmp.eq.s32.totalorder %s20, 1
      %p131 = por %p129, %p130
      %p132 = scmp.ne.s32.totalorder %s124, %s127
      %p133 = scmp.eq.s32.totalorder %s20, 0
      %p134 = por %p132, %p133
      %p135 = scmp.ne.s32.totalorder %s124, %s127
      %p136 = scmp.eq.s32.totalorder %s25, 1
      %p137 = por %p135, %p136
      %p138 = scmp.ne.s32.totalorder %s127, %s128
      %p139 = scmp.eq.s32.totalorder %s25, 0
      %p140 = por %p138, %p139
      %p141 = scmp.ne.s32.totalorder %s127, %s128
      %p142 = scmp.eq.s32.totalorder %s26, 1
      %p143 = por %p141, %p142
      %p145 = scmp.ne.s32.totalorder %s128, %s144
      %p146 = scmp.eq.s32.totalorder %s26, 0
      %p147 = por %p145, %p146
      %p148 = scmp.le.s32.totalorder 1, %s20
      %p149 = scmp.lt.s32.totalorder %s20, 3
      %p150 = pnand %p148, %p149
      %p151 = pneg %p150
      // Predicated region
      $region9: #{tpu_custom_call.1} parent=5 // pred_check
        _
      $region10: #{tpu_custom_call.1} parent=5 // pred_check_branch
        %153 = sbr.rel (%p150) target = $region12
      $region11: #{tpu_custom_call.1} parent=5 // pred_region
        %s154 = ssub.s32 %s20, 1
        // Predicated region
        $region13: #{tpu_custom_call.1} parent=11 // pred_check
          %p155 = pneg %p93
        $region14: #{tpu_custom_call.1} parent=11 // pred_check_branch
          %157 = sbr.rel (%p155) target = $region16
        $region15: #{tpu_custom_call.1} parent=11 // pred_region
          %s159 = ssub.s32 256, 256
          %160 = vsyncadd [#allocation6], %s159
          %s161 = sshll.u32 [#allocation7], 4
          %s162 = int_to_ptr.vmem [resolvable:$true] %s161
          %167 = dma.hbm_to_vmem [thread:$0]  %s2, 256, %s162, [#allocation6], 64, 64, 4
        $region16: #{tpu_custom_call.1} parent=11 // pred_fallthru
          _
        // Predicated region
        $region17: #{tpu_custom_call.1} parent=11 // pred_check
          %p168 = pneg %p114
        $region18: #{tpu_custom_call.1} parent=11 // pred_check_branch
          %170 = sbr.rel (%p168) target = $region20
        $region19: #{tpu_custom_call.1} parent=11 // pred_region
          %s172 = ssub.s32 2048, 2048
          %173 = vsyncadd [#allocation9], %s172
          %s174 = sshll.u32 [#allocation8], 4
          %s175 = int_to_ptr.vmem [resolvable:$true] %s174
          %180 = dma.hbm_to_vmem [thread:$0]  %s3, 2048, %s175, [#allocation9], 128, 128, 8
        $region20: #{tpu_custom_call.1} parent=11 // pred_fallthru
          _
      $region12: #{tpu_custom_call.1} parent=5 // pred_fallthru
        _
      %p181 = scmp.lt.s32.totalorder %s20, 2
      // Predicated region
      $region21: #{tpu_custom_call.1} parent=5 // pred_check
        %p182 = pneg %p181
      $region22: #{tpu_custom_call.1} parent=5 // pred_check_branch
        %184 = sbr.rel (%p182) target = $region24
      $region23: #{tpu_custom_call.1} parent=5 // pred_region
        // Predicated region
        $region25: #{tpu_custom_call.1} parent=23 // pred_check
          %p185 = pneg %p40
        $region26: #{tpu_custom_call.1} parent=23 // pred_check_branch
          %187 = sbr.rel (%p185) target = $region28
        $region27: #{tpu_custom_call.1} parent=23 // pred_region
          %s188 = sand.u32 %s30, 1
          %s189 = scalar_lea.sflag [#allocation3], %s188
          %s190 = sand.u32 %s30, 1
          %s191 = smul.addr %s190, 48
          %s192 = scalar_lea.vmem [#allocation2], %s191
          %s193 = smul.u32 3, %s20
          %s195 = ssub.s32 768, 768
          %196 = vsyncadd %s189, %s195
          %s197 = smul.addr %s193, 2
          %s198 = smul.addr %s197, 128
          %s199 = scalar_lea.hbm %s0, %s198
          %s200 = sshll.u32 %s192, 4
          %s201 = int_to_ptr.vmem [resolvable:$true] %s200
          %206 = dma.hbm_to_vmem [thread:$0]  %s199, 768, %s201, %s189, 128, 128, 8
        $region28: #{tpu_custom_call.1} parent=23 // pred_fallthru
          _
        // Predicated region
        $region29: #{tpu_custom_call.1} parent=23 // pred_check
          %p207 = pneg %p66
        $region30: #{tpu_custom_call.1} parent=23 // pred_check_branch
          %209 = sbr.rel (%p207) target = $region32
        $region31: #{tpu_custom_call.1} parent=23 // pred_region
          %s210 = sand.u32 %s20, 1
          %s211 = scalar_lea.sflag [#allocation6], %s210
          %s212 = sand.u32 %s56, 1
          %s213 = smul.addr %s212, 48
          %s214 = scalar_lea.vmem [#allocation5], %s213
          %s215 = smul.u32 3, %s20
          %s217 = ssub.s32 768, 768
          %218 = vsyncadd %s211, %s217
          %s219 = smul.addr %s215, 2
          %s220 = smul.addr %s219, 128
          %s221 = scalar_lea.hbm %s1, %s220
          %s222 = sshll.u32 %s214, 4
          %s223 = int_to_ptr.vmem [resolvable:$true] %s222
          %228 = dma.hbm_to_vmem [thread:$0]  %s221, 768, %s223, %s211, 128, 128, 8
        $region32: #{tpu_custom_call.1} parent=23 // pred_fallthru
          _
      $region24: #{tpu_custom_call.1} parent=5 // pred_fallthru
        _
      %p229 = scmp.le.s32.totalorder 1, %s20
      %p230 = scmp.lt.s32.totalorder %s20, 3
      %p231 = pnand %p229, %p230
      %p232 = pneg %p231
      // Predicated region
      $region33: #{tpu_custom_call.1} parent=5 // pred_check
        _
      $region34: #{tpu_custom_call.1} parent=5 // pred_check_branch
        %234 = sbr.rel (%p231) target = $region36
      $region35: #{tpu_custom_call.1} parent=5 // pred_region
        %s235 = ssub.s32 %s20, 1
        %s236 = sand.u32 %s33, 1
        %s237 = scalar_lea.sflag [#allocation3], %s236
        %s238 = sand.u32 %s33, 1
        %s239 = smul.addr %s238, 48
        %s240 = scalar_lea.vmem [#allocation2], %s239
        // Predicated region
        $region37: #{tpu_custom_call.1} parent=35 // pred_check
          %p241 = pneg %p46
        $region38: #{tpu_custom_call.1} parent=35 // pred_check_branch
          %243 = sbr.rel (%p241) target = $region40
        $region39: #{tpu_custom_call.1} parent=35 // pred_region
          %244 = dma.done %s237, 768
        $region40: #{tpu_custom_call.1} parent=35 // pred_fallthru
          _
        %s245 = sand.u32 %s25, 1
        %s246 = scalar_lea.sflag [#allocation6], %s245
        %s247 = sand.u32 %s59, 1
        %s248 = smul.addr %s247, 48
        %s249 = scalar_lea.vmem [#allocation5], %s248
        // Predicated region
        $region41: #{tpu_custom_call.1} parent=35 // pred_check
          %p250 = pneg %p72
        $region42: #{tpu_custom_call.1} parent=35 // pred_check_branch
          %252 = sbr.rel (%p250) target = $region44
        $region43: #{tpu_custom_call.1} parent=35 // pred_region
          %253 = dma.done %s246, 768
        $region44: #{tpu_custom_call.1} parent=35 // pred_fallthru
          _
        // Predicated region
        $region45: #{tpu_custom_call.1} parent=35 // pred_check
          %p254 = pneg %p93
        $region46: #{tpu_custom_call.1} parent=35 // pred_check_branch
          %256 = sbr.rel (%p254) target = $region48
        $region47: #{tpu_custom_call.1} parent=35 // pred_region
          %257 = dma.done [#allocation6], 256
        $region48: #{tpu_custom_call.1} parent=35 // pred_fallthru
          _
        // Predicated region
        $region49: #{tpu_custom_call.1} parent=35 // pred_check
          %p258 = pneg %p114
        $region50: #{tpu_custom_call.1} parent=35 // pred_check_branch
          %260 = sbr.rel (%p258) target = $region52
        $region51: #{tpu_custom_call.1} parent=35 // pred_region
          %261 = dma.done [#allocation9], 2048
        $region52: #{tpu_custom_call.1} parent=35 // pred_fallthru
          _
        %s262 = sand.u32 %s33, 1
        %s263 = scalar_lea.sflag [#allocation3], %s262
        %s264 = sand.u32 %s33, 1
        %s265 = smul.addr %s264, 48
        %s266 = scalar_lea.vmem [#allocation2], %s265
        %p267 = pneg %p46
        %p268 = pneg %p43
        %s269 = sand.u32 %s25, 1
        %s270 = scalar_lea.sflag [#allocation6], %s269
        %s271 = sand.u32 %s59, 1
        %s272 = smul.addr %s271, 48
        %s273 = scalar_lea.vmem [#allocation5], %s272
        %p274 = pneg %p72
        %p275 = pneg %p69
        %p276 = pneg %p93
        %p277 = pneg %p90
        %p278 = pneg %p114
        %p279 = pneg %p111
        %p280 = pneg %p140
        %p281 = pneg %p137
        %s282 = sand.u32 %s127, 1
        %s283 = scalar_lea.sflag [#allocation4], %s282
        %s284 = sand.u32 %s127, 1
        %s285 = scalar_lea.vmem [#allocation10], %s284
        %s286 = smul.u32 3, %s25
        %s287 = smul.u32 3, %s25
        %v289 = vld [vmem:[%s249] sm:$0xff]
        %v290 = vld [vmem:[%s249 + $0x8] sm:$0xff]
        %v291 = vld [vmem:[%s249 + $0x10] sm:$0xff]
        %v292 = vld [vmem:[%s249 + $0x18] sm:$0xff]
        %v293 = vld [vmem:[%s249 + $0x20] sm:$0xff]
        %v294 = vld [vmem:[%s249 + $0x28] sm:$0xff]
        %v295 = vld [vmem:[%s240] sm:$0xff]
        %v296 = vld [vmem:[%s240 + $0x8] sm:$0xff]
        %v297 = vld [vmem:[%s240 + $0x10] sm:$0xff]
        %v298 = vld [vmem:[%s240 + $0x18] sm:$0xff]
        %v299 = vld [vmem:[%s240 + $0x20] sm:$0xff]
        %v300 = vld [vmem:[%s240 + $0x28] sm:$0xff]
        %v301 = vsub.f32 %v295, %v289
        %v302 = vsub.f32 %v296, %v290
        %v303 = vsub.f32 %v297, %v291
        %v304 = vsub.f32 %v298, %v292
        %v305 = vsub.f32 %v299, %v293
        %v306 = vsub.f32 %v300, %v294
        %v307 = vpack.c.bf16 %v302, %v301
        %v308 = vpack.c.bf16 %v304, %v303
        %v309 = vpack.c.bf16 %v306, %v305
        %v310 = vld [vmem:[#allocation8] sm:$0xff]
        %v311 = vld [vmem:[#allocation8 + $0x8] sm:$0xff]
        %v312 = vld [vmem:[#allocation8 + $0x10] sm:$0xff]
        %v313 = vld [vmem:[#allocation8 + $0x18] sm:$0xff]
        %v314 = vld [vmem:[#allocation8 + $0x20] sm:$0xff]
        %v315 = vld [vmem:[#allocation8 + $0x28] sm:$0xff]
        %v316 = vld [vmem:[#allocation8 + $0x30] sm:$0xff]
        %v317 = vld [vmem:[#allocation8 + $0x38] sm:$0xff]
        %v318 = vld [vmem:[#allocation8 + $0x40] sm:$0xff]
        %v319 = vld [vmem:[#allocation8 + $0x48] sm:$0xff]
        %v320 = vld [vmem:[#allocation8 + $0x50] sm:$0xff]
        %v321 = vld [vmem:[#allocation8 + $0x58] sm:$0xff]
        %v322 = vld [vmem:[#allocation8 + $0x60] sm:$0xff]
        %v323 = vld [vmem:[#allocation8 + $0x68] sm:$0xff]
        %v324 = vld [vmem:[#allocation8 + $0x70] sm:$0xff]
        %v325 = vld [vmem:[#allocation8 + $0x78] sm:$0xff]
        %v342 = vunpack.c.l.b16 %v310
        %v343 = vunpack.c.h.b16 %v310
        %v344 = vunpack.c.l.b16 %v311
        %v345 = vunpack.c.h.b16 %v311
        %v346 = vunpack.c.l.b16 %v312
        %v347 = vunpack.c.h.b16 %v312
        %v348 = vunpack.c.l.b16 %v313
        %v349 = vunpack.c.h.b16 %v313
        %v350 = vunpack.c.l.b16 %v314
        %v351 = vunpack.c.h.b16 %v314
        %v352 = vunpack.c.l.b16 %v315
        %v353 = vunpack.c.h.b16 %v315
        %v354 = vunpack.c.l.b16 %v316
        %v355 = vunpack.c.h.b16 %v316
        %v356 = vunpack.c.l.b16 %v317
        %v357 = vunpack.c.h.b16 %v317
        %v358 = vunpack.c.l.b16 %v318
        %v359 = vunpack.c.h.b16 %v318
        %v360 = vunpack.c.l.b16 %v319
        %v361 = vunpack.c.h.b16 %v319
        %v362 = vunpack.c.l.b16 %v320
        %v363 = vunpack.c.h.b16 %v320
        %v364 = vunpack.c.l.b16 %v321
        %v365 = vunpack.c.h.b16 %v321
        %v366 = vunpack.c.l.b16 %v322
        %v367 = vunpack.c.h.b16 %v322
        %v368 = vunpack.c.l.b16 %v323
        %v369 = vunpack.c.h.b16 %v323
        %v370 = vunpack.c.l.b16 %v324
        %v371 = vunpack.c.h.b16 %v324
        %v372 = vunpack.c.l.b16 %v325
        %v373 = vunpack.c.h.b16 %v325
        %v374 = vpack.c.b16 %v344, %v342
        %v375 = vpack.c.b16 %v345, %v343
        %v376 = vpack.c.b16 %v348, %v346
        %v377 = vpack.c.b16 %v349, %v347
        %v378 = vpack.c.b16 %v352, %v350
        %v379 = vpack.c.b16 %v353, %v351
        %v380 = vpack.c.b16 %v356, %v354
        %v381 = vpack.c.b16 %v357, %v355
        %v382 = vpack.c.b16 %v360, %v358
        %v383 = vpack.c.b16 %v361, %v359
        %v384 = vpack.c.b16 %v364, %v362
        %v385 = vpack.c.b16 %v365, %v363
        %v386 = vpack.c.b16 %v368, %v366
        %v387 = vpack.c.b16 %v369, %v367
        %v388 = vpack.c.b16 %v372, %v370
        %v389 = vpack.c.b16 %v373, %v371
        %406 = vmatprep.subr.bf16.mxu0 %v375
        %407 = vmatpush1.bf16.msra.mxu0 %v374
        %408 = vmatprep.subr.bf16.mxu0 %v377
        %409 = vmatpush1.bf16.msra.mxu0 %v376
        %410 = vmatprep.subr.bf16.mxu0 %v379
        %411 = vmatpush1.bf16.msra.mxu0 %v378
        %412 = vmatprep.subr.bf16.mxu0 %v381
        %413 = vmatpush1.bf16.msra.mxu0 %v380
        %414 = vmatprep.subr.bf16.mxu0 %v383
        %415 = vmatpush1.bf16.msra.mxu0 %v382
        %416 = vmatprep.subr.bf16.mxu0 %v385
        %417 = vmatpush1.bf16.msra.mxu0 %v384
        %418 = vmatprep.subr.bf16.mxu0 %v387
        %419 = vmatpush1.bf16.msra.mxu0 %v386
        %420 = vmatprep.subr.bf16.mxu0 %v389
        %421 = vmatpush1.bf16.msra.mxu0 %v388
        %422 = vmatprep.subr.bf16.mxu0 0
        %423 = vmatpush1.bf16.msra.mxu0 0
        %424 = vmatprep.subr.bf16.mxu0 0
        %425 = vmatpush1.bf16.msra.mxu0 0
        %426 = vmatprep.subr.bf16.mxu0 0
        %427 = vmatpush1.bf16.msra.mxu0 0
        %428 = vmatprep.subr.bf16.mxu0 0
        %429 = vmatpush1.bf16.msra.mxu0 0
        %430 = vmatprep.subr.bf16.mxu0 0
        %431 = vmatpush1.bf16.msra.mxu0 0
        %432 = vmatprep.subr.bf16.mxu0 0
        %433 = vmatpush1.bf16.msra.mxu0 0
        %434 = vmatprep.subr.bf16.mxu0 0
        %435 = vmatpush1.bf16.msra.mxu0 0
        %436 = vmatprep.subr.bf16.mxu0 0
        %437 = vmatpush1.bf16.msra.mxu0 0
        %438 = vmatprep.mubr.bf16.mxu0 0
        %439 = vmatmul.mubr.bf16.gmra.mrb[0].mxu0 %v307
        %v440 = vpop.f32.mrb[0].mxu0
        %v441 = vadd.f32 0.0, %v440
        %v442 = vpop.f32.mrb[0].mxu0
        %v443 = vadd.f32 0.0, %v442
        %v444 = vpop.f32.mrb[0].mxu0
        %v445 = vadd.f32 0.0, %v444
        %v446 = vpop.f32.mrb[0].mxu0
        %v447 = vadd.f32 0.0, %v446
        %448 = vmatprep.mubr.bf16.mxu0 0
        %449 = vmatmul.mubr.bf16.gmra.mrb[0].mxu0 %v308
        %v450 = vpop.f32.mrb[0].mxu0
        %v451 = vadd.f32 0.0, %v450
        %v452 = vpop.f32.mrb[0].mxu0
        %v453 = vadd.f32 0.0, %v452
        %v454 = vpop.f32.mrb[0].mxu0
        %v455 = vadd.f32 0.0, %v454
        %v456 = vpop.f32.mrb[0].mxu0
        %v457 = vadd.f32 0.0, %v456
        %458 = vmatprep.mubr.bf16.mxu0 0
        %459 = vmatmul.mubr.bf16.gmra.mrb[0].mxu0 %v309
        %v460 = vpop.f32.mrb[0].mxu0
        %v461 = vadd.f32 0.0, %v460
        %v462 = vpop.f32.mrb[0].mxu0
        %v463 = vadd.f32 0.0, %v462
        %v464 = vpop.f32.mrb[0].mxu0
        %v465 = vadd.f32 0.0, %v464
        %v466 = vpop.f32.mrb[0].mxu0
        %v467 = vadd.f32 0.0, %v466
        %468 = vdwg.mxu0
        %v469 = vpack.c.bf16 %v445, %v441
        %v470 = vpack.c.bf16 %v447, %v443
        %v471 = vpack.c.bf16 %v455, %v451
        %v472 = vpack.c.bf16 %v457, %v453
        %v473 = vpack.c.bf16 %v465, %v461
        %v474 = vpack.c.bf16 %v467, %v463
        %v475 = vld [vmem:[#allocation7] sm:$0xf]
        %v476 = vld [vmem:[#allocation7 + $0x4] sm:$0xf]
        %s477 = scalar_lea.vmem [#allocation7], 8
        %v478 = vld [vmem:[%s477] sm:$0xf]
        %v479 = vld [vmem:[%s477 + $0x4] sm:$0xf]
        %v482 = vunpack.c.l.b16 %v478
        %v483 = vunpack.c.l.b16 %v479
        %v484 = vpack.c.b16 %v483, %v482
        %vm485 = vcmask 130048
        %v487 = vsel %vm485, %v484, 0
        %489 = vmatprep.subr.bf16.mxu0 0
        %490 = vmatpush1.bf16.msra.mxu0 %v470
        %491 = vmatprep.subr.bf16.mxu0 0
        %492 = vmatpush1.bf16.msra.mxu0 0
        %493 = vmatprep.subr.bf16.mxu0 0
        %494 = vmatpush1.bf16.msra.mxu0 0
        %495 = vmatprep.subr.bf16.mxu0 0
        %496 = vmatpush1.bf16.msra.mxu0 0
        %497 = vmatprep.subr.bf16.mxu0 0
        %498 = vmatpush1.bf16.msra.mxu0 0
        %499 = vmatprep.subr.bf16.mxu0 0
        %500 = vmatpush1.bf16.msra.mxu0 0
        %501 = vmatprep.subr.bf16.mxu0 0
        %502 = vmatpush1.bf16.msra.mxu0 0
        %503 = vmatprep.subr.bf16.mxu0 0
        %504 = vmatpush1.bf16.msra.mxu0 0
        %505 = vmatprep.subr.bf16.mxu0 0
        %506 = vmatpush1.bf16.msra.mxu0 0
        %507 = vmatprep.subr.bf16.mxu0 0
        %508 = vmatpush1.bf16.msra.mxu0 0
        %509 = vmatprep.subr.bf16.mxu0 0
        %510 = vmatpush1.bf16.msra.mxu0 0
        %511 = vmatprep.subr.bf16.mxu0 0
        %512 = vmatpush1.bf16.msra.mxu0 0
        %513 = vmatprep.subr.bf16.mxu0 0
        %514 = vmatpush1.bf16.msra.mxu0 0
        %515 = vmatprep.subr.bf16.mxu0 0
        %516 = vmatpush1.bf16.msra.mxu0 0
        %517 = vmatprep.subr.bf16.mxu0 0
        %518 = vmatpush1.bf16.msra.mxu0 0
        %519 = vmatprep.subr.bf16.mxu0 0
        %520 = vmatpush1.bf16.msra.mxu0 0
        %521 = vmatprep.mubr.bf16.mxu0 0
        %522 = vmatmul.mubr.bf16.gmra.mrb[0].mxu0 %v487
        %v523 = vpop.f32.mrb[0].mxu0
        %v524 = vadd.f32 0.0, %v523
        %v525 = vpop.f32.mrb[0].mxu0
        %v526 = vpop.f32.mrb[0].mxu0
        %v527 = vadd.f32 0.0, %v526
        %v528 = vpop.f32.mrb[0].mxu0
        %529 = vdwg.mxu0
        %v532 = vunpack.c.l.b16 %v475
        %v533 = vunpack.c.l.b16 %v476
        %v534 = vpack.c.b16 %v533, %v532
        %v536 = vsel %vm485, %v534, 0
        %538 = vmatprep.subr.bf16.mxu0 0
        %539 = vmatpush1.bf16.msra.mxu0 %v469
        %540 = vmatprep.subr.bf16.mxu0 0
        %541 = vmatpush1.bf16.msra.mxu0 0
        %542 = vmatprep.subr.bf16.mxu0 0
        %543 = vmatpush1.bf16.msra.mxu0 0
        %544 = vmatprep.subr.bf16.mxu0 0
        %545 = vmatpush1.bf16.msra.mxu0 0
        %546 = vmatprep.subr.bf16.mxu0 0
        %547 = vmatpush1.bf16.msra.mxu0 0
        %548 = vmatprep.subr.bf16.mxu0 0
        %549 = vmatpush1.bf16.msra.mxu0 0
        %550 = vmatprep.subr.bf16.mxu0 0
        %551 = vmatpush1.bf16.msra.mxu0 0
        %552 = vmatprep.subr.bf16.mxu0 0
        %553 = vmatpush1.bf16.msra.mxu0 0
        %554 = vmatprep.subr.bf16.mxu0 0
        %555 = vmatpush1.bf16.msra.mxu0 0
        %556 = vmatprep.subr.bf16.mxu0 0
        %557 = vmatpush1.bf16.msra.mxu0 0
        %558 = vmatprep.subr.bf16.mxu0 0
        %559 = vmatpush1.bf16.msra.mxu0 0
        %560 = vmatprep.subr.bf16.mxu0 0
        %561 = vmatpush1.bf16.msra.mxu0 0
        %562 = vmatprep.subr.bf16.mxu0 0
        %563 = vmatpush1.bf16.msra.mxu0 0
        %564 = vmatprep.subr.bf16.mxu0 0
        %565 = vmatpush1.bf16.msra.mxu0 0
        %566 = vmatprep.subr.bf16.mxu0 0
        %567 = vmatpush1.bf16.msra.mxu0 0
        %568 = vmatprep.subr.bf16.mxu0 0
        %569 = vmatpush1.bf16.msra.mxu0 0
        %570 = vmatprep.mubr.bf16.mxu0 0
        %571 = vmatmul.mubr.bf16.gmra.mrb[0].mxu0 %v536
        %v572 = vpop.f32.mrb[0].mxu0
        %v573 = vadd.f32 %v524, %v572
        %v574 = vpop.f32.mrb[0].mxu0
        %v575 = vpop.f32.mrb[0].mxu0
        %v576 = vadd.f32 %v527, %v575
        %v577 = vpop.f32.mrb[0].mxu0
        %578 = vdwg.mxu0
        %v579 = vand.u32 2147483647, %v573
        %v580 = vand.u32 2147483647, %v576
        %v581 = vadd.f32 %v579, 0.0
        %v582 = vadd.f32 %v580, 0.0
        %583 = vmatprep.subr.bf16.mxu0 0
        %584 = vmatpush1.bf16.msra.mxu0 %v472
        %585 = vmatprep.subr.bf16.mxu0 0
        %586 = vmatpush1.bf16.msra.mxu0 0
        %587 = vmatprep.subr.bf16.mxu0 0
        %588 = vmatpush1.bf16.msra.mxu0 0
        %589 = vmatprep.subr.bf16.mxu0 0
        %590 = vmatpush1.bf16.msra.mxu0 0
        %591 = vmatprep.subr.bf16.mxu0 0
        %592 = vmatpush1.bf16.msra.mxu0 0
        %593 = vmatprep.subr.bf16.mxu0 0
        %594 = vmatpush1.bf16.msra.mxu0 0
        %595 = vmatprep.subr.bf16.mxu0 0
        %596 = vmatpush1.bf16.msra.mxu0 0
        %597 = vmatprep.subr.bf16.mxu0 0
        %598 = vmatpush1.bf16.msra.mxu0 0
        %599 = vmatprep.subr.bf16.mxu0 0
        %600 = vmatpush1.bf16.msra.mxu0 0
        %601 = vmatprep.subr.bf16.mxu0 0
        %602 = vmatpush1.bf16.msra.mxu0 0
        %603 = vmatprep.subr.bf16.mxu0 0
        %604 = vmatpush1.bf16.msra.mxu0 0
        %605 = vmatprep.subr.bf16.mxu0 0
        %606 = vmatpush1.bf16.msra.mxu0 0
        %607 = vmatprep.subr.bf16.mxu0 0
        %608 = vmatpush1.bf16.msra.mxu0 0
        %609 = vmatprep.subr.bf16.mxu0 0
        %610 = vmatpush1.bf16.msra.mxu0 0
        %611 = vmatprep.subr.bf16.mxu0 0
        %612 = vmatpush1.bf16.msra.mxu0 0
        %613 = vmatprep.subr.bf16.mxu0 0
        %614 = vmatpush1.bf16.msra.mxu0 0
        %615 = vmatprep.mubr.bf16.mxu0 0
        %616 = vmatmul.mubr.bf16.gmra.mrb[0].mxu0 %v487
        %v617 = vpop.f32.mrb[0].mxu0
        %v618 = vadd.f32 0.0, %v617
        %v619 = vpop.f32.mrb[0].mxu0
        %v620 = vpop.f32.mrb[0].mxu0
        %v621 = vadd.f32 0.0, %v620
        %v622 = vpop.f32.mrb[0].mxu0
        %623 = vdwg.mxu0
        %624 = vmatprep.subr.bf16.mxu0 0
        %625 = vmatpush1.bf16.msra.mxu0 %v471
        %626 = vmatprep.subr.bf16.mxu0 0
        %627 = vmatpush1.bf16.msra.mxu0 0
        %628 = vmatprep.subr.bf16.mxu0 0
        %629 = vmatpush1.bf16.msra.mxu0 0
        %630 = vmatprep.subr.bf16.mxu0 0
        %631 = vmatpush1.bf16.msra.mxu0 0
        %632 = vmatprep.subr.bf16.mxu0 0
        %633 = vmatpush1.bf16.msra.mxu0 0
        %634 = vmatprep.subr.bf16.mxu0 0
        %635 = vmatpush1.bf16.msra.mxu0 0
        %636 = vmatprep.subr.bf16.mxu0 0
        %637 = vmatpush1.bf16.msra.mxu0 0
        %638 = vmatprep.subr.bf16.mxu0 0
        %639 = vmatpush1.bf16.msra.mxu0 0
        %640 = vmatprep.subr.bf16.mxu0 0
        %641 = vmatpush1.bf16.msra.mxu0 0
        %642 = vmatprep.subr.bf16.mxu0 0
        %643 = vmatpush1.bf16.msra.mxu0 0
        %644 = vmatprep.subr.bf16.mxu0 0
        %645 = vmatpush1.bf16.msra.mxu0 0
        %646 = vmatprep.subr.bf16.mxu0 0
        %647 = vmatpush1.bf16.msra.mxu0 0
        %648 = vmatprep.subr.bf16.mxu0 0
        %649 = vmatpush1.bf16.msra.mxu0 0
        %650 = vmatprep.subr.bf16.mxu0 0
        %651 = vmatpush1.bf16.msra.mxu0 0
        %652 = vmatprep.subr.bf16.mxu0 0
        %653 = vmatpush1.bf16.msra.mxu0 0
        %654 = vmatprep.subr.bf16.mxu0 0
        %655 = vmatpush1.bf16.msra.mxu0 0
        %656 = vmatprep.mubr.bf16.mxu0 0
        %657 = vmatmul.mubr.bf16.gmra.mrb[0].mxu0 %v536
        %v658 = vpop.f32.mrb[0].mxu0
        %v659 = vadd.f32 %v618, %v658
        %v660 = vpop.f32.mrb[0].mxu0
        %v661 = vpop.f32.mrb[0].mxu0
        %v662 = vadd.f32 %v621, %v661
        %v663 = vpop.f32.mrb[0].mxu0
        %664 = vdwg.mxu0
        %v665 = vand.u32 2147483647, %v659
        %v666 = vand.u32 2147483647, %v662
        %v667 = vadd.f32 %v581, %v665
        %v668 = vadd.f32 %v582, %v666
        %669 = vmatprep.subr.bf16.mxu0 0
        %670 = vmatpush1.bf16.msra.mxu0 %v474
        %671 = vmatprep.subr.bf16.mxu0 0
        %672 = vmatpush1.bf16.msra.mxu0 0
        %673 = vmatprep.subr.bf16.mxu0 0
        %674 = vmatpush1.bf16.msra.mxu0 0
        %675 = vmatprep.subr.bf16.mxu0 0
        %676 = vmatpush1.bf16.msra.mxu0 0
        %677 = vmatprep.subr.bf16.mxu0 0
        %678 = vmatpush1.bf16.msra.mxu0 0
        %679 = vmatprep.subr.bf16.mxu0 0
        %680 = vmatpush1.bf16.msra.mxu0 0
        %681 = vmatprep.subr.bf16.mxu0 0
        %682 = vmatpush1.bf16.msra.mxu0 0
        %683 = vmatprep.subr.bf16.mxu0 0
        %684 = vmatpush1.bf16.msra.mxu0 0
        %685 = vmatprep.subr.bf16.mxu0 0
        %686 = vmatpush1.bf16.msra.mxu0 0
        %687 = vmatprep.subr.bf16.mxu0 0
        %688 = vmatpush1.bf16.msra.mxu0 0
        %689 = vmatprep.subr.bf16.mxu0 0
        %690 = vmatpush1.bf16.msra.mxu0 0
        %691 = vmatprep.subr.bf16.mxu0 0
        %692 = vmatpush1.bf16.msra.mxu0 0
        %693 = vmatprep.subr.bf16.mxu0 0
        %694 = vmatpush1.bf16.msra.mxu0 0
        %695 = vmatprep.subr.bf16.mxu0 0
        %696 = vmatpush1.bf16.msra.mxu0 0
        %697 = vmatprep.subr.bf16.mxu0 0
        %698 = vmatpush1.bf16.msra.mxu0 0
        %699 = vmatprep.subr.bf16.mxu0 0
        %700 = vmatpush1.bf16.msra.mxu0 0
        %701 = vmatprep.mubr.bf16.mxu0 0
        %702 = vmatmul.mubr.bf16.gmra.mrb[0].mxu0 %v487
        %v703 = vpop.f32.mrb[0].mxu0
        %v704 = vadd.f32 0.0, %v703
        %v705 = vpop.f32.mrb[0].mxu0
        %v706 = vpop.f32.mrb[0].mxu0
        %v707 = vadd.f32 0.0, %v706
        %v708 = vpop.f32.mrb[0].mxu0
        %709 = vdwg.mxu0
        %710 = vmatprep.subr.bf16.mxu0 0
        %711 = vmatpush1.bf16.msra.mxu0 %v473
        %712 = vmatprep.subr.bf16.mxu0 0
        %713 = vmatpush1.bf16.msra.mxu0 0
        %714 = vmatprep.subr.bf16.mxu0 0
        %715 = vmatpush1.bf16.msra.mxu0 0
        %716 = vmatprep.subr.bf16.mxu0 0
        %717 = vmatpush1.bf16.msra.mxu0 0
        %718 = vmatprep.subr.bf16.mxu0 0
        %719 = vmatpush1.bf16.msra.mxu0 0
        %720 = vmatprep.subr.bf16.mxu0 0
        %721 = vmatpush1.bf16.msra.mxu0 0
        %722 = vmatprep.subr.bf16.mxu0 0
        %723 = vmatpush1.bf16.msra.mxu0 0
        %724 = vmatprep.subr.bf16.mxu0 0
        %725 = vmatpush1.bf16.msra.mxu0 0
        %726 = vmatprep.subr.bf16.mxu0 0
        %727 = vmatpush1.bf16.msra.mxu0 0
        %728 = vmatprep.subr.bf16.mxu0 0
        %729 = vmatpush1.bf16.msra.mxu0 0
        %730 = vmatprep.subr.bf16.mxu0 0
        %731 = vmatpush1.bf16.msra.mxu0 0
        %732 = vmatprep.subr.bf16.mxu0 0
        %733 = vmatpush1.bf16.msra.mxu0 0
        %734 = vmatprep.subr.bf16.mxu0 0
        %735 = vmatpush1.bf16.msra.mxu0 0
        %736 = vmatprep.subr.bf16.mxu0 0
        %737 = vmatpush1.bf16.msra.mxu0 0
        %738 = vmatprep.subr.bf16.mxu0 0
        %739 = vmatpush1.bf16.msra.mxu0 0
        %740 = vmatprep.subr.bf16.mxu0 0
        %741 = vmatpush1.bf16.msra.mxu0 0
        %742 = vmatprep.mubr.bf16.mxu0 0
        %743 = vmatmul.mubr.bf16.gmra.mrb[0].mxu0 %v536
        %v744 = vpop.f32.mrb[0].mxu0
        %v745 = vadd.f32 %v704, %v744
        %v746 = vpop.f32.mrb[0].mxu0
        %v747 = vpop.f32.mrb[0].mxu0
        %v748 = vadd.f32 %v707, %v747
        %v749 = vpop.f32.mrb[0].mxu0
        %750 = vdwg.mxu0
        %v751 = vand.u32 2147483647, %v745
        %v752 = vand.u32 2147483647, %v748
        %v753 = vadd.f32 %v667, %v751
        %v754 = vadd.f32 %v668, %v752
        %v755 = vadd.f32 %v753, %v754
        %756 = vadd.xlane.f32.xlu0 %v755
        %v757 = vpop.xlane.xlu0 %756
        %v758 = vrot.slane %v757, 4
        %v759 = vadd.f32 %v757, %v758
        %v760 = vrot.slane %v759, 2
        %v761 = vadd.f32 %v759, %v760
        %v762 = vrot.slane %v761, 1
        %v763 = vadd.f32 %v761, %v762
        %s764 = vtos %v763
        %v765 = vstv %s764
        %v766 = vadd.f32 %v765, 0.0
        %767 = vst [vmem:[%s285] sm:$0x1] %v766
        %s768 = sand.u32 %s127, 1
        %s769 = scalar_lea.sflag [#allocation4], %s768
        %s770 = sand.u32 %s127, 1
        %s771 = scalar_lea.vmem [#allocation10], %s770
        // Predicated region
        $region53: #{tpu_custom_call.1} parent=35 // pred_check
          %p772 = pneg %p137
        $region54: #{tpu_custom_call.1} parent=35 // pred_check_branch
          %774 = sbr.rel (%p772) target = $region56
        $region55: #{tpu_custom_call.1} parent=35 // pred_region
          %s776 = ssub.s32 16, 16
          %777 = vsyncadd %s769, %s776
          %s778 = smul.addr %s25, 16
          %s779 = scalar_lea.hbm %s4, %s778
          %s781 = sshll.u32 %s771, 4
          %s782 = int_to_ptr.vmem [resolvable:$true] %s781
          %784 = dma.vmem_to_hbm [thread:$0]  %s782, 16, %s779, %s769
        $region56: #{tpu_custom_call.1} parent=35 // pred_fallthru
          _
      $region36: #{tpu_custom_call.1} parent=5 // pred_fallthru
        _
      %p785 = scmp.le.s32.totalorder 2, %s20
      // Predicated region
      $region57: #{tpu_custom_call.1} parent=5 // pred_check
        %p786 = pneg %p785
      $region58: #{tpu_custom_call.1} parent=5 // pred_check_branch
        %788 = sbr.rel (%p786) target = $region60
      $region59: #{tpu_custom_call.1} parent=5 // pred_region
        %s789 = ssub.s32 %s20, 2
        // Predicated region
        $region61: #{tpu_custom_call.1} parent=59 // pred_check
          %p790 = pneg %p143
        $region62: #{tpu_custom_call.1} parent=59 // pred_check_branch
          %792 = sbr.rel (%p790) target = $region64
        $region63: #{tpu_custom_call.1} parent=59 // pred_region
          %s793 = sand.u32 %s128, 1
          %s794 = scalar_lea.sflag [#allocation4], %s793
          %s795 = sand.u32 %s128, 1
          %s796 = scalar_lea.vmem [#allocation10], %s795
          %797 = dma.done %s794, 16
        $region64: #{tpu_custom_call.1} parent=59 // pred_fallthru
          _
      $region60: #{tpu_custom_call.1} parent=5 // pred_fallthru
        _
    $region6: #{tpu_custom_call.1} parent=1 // loop_footer
      %s24 = sadd.s32 1, %s20
    $region7: #{tpu_custom_call.1} parent=1 // loop_footer_branch
      %19 = sbr.rel target = $region3
    $region8: #{tpu_custom_call.1} parent=1 // loop_exit
      _
    %798 = vsyncpa [#allocation3], 1
    %s799 = scalar_lea.sflag [#allocation3], 1
    %800 = vsyncpa %s799, 1
    %801 = vsyncpa [#allocation6], 1
    %s802 = scalar_lea.sflag [#allocation6], 1
    %803 = vsyncpa %s802, 1
    %804 = vsyncpa [#allocation9], 1
    %805 = vsyncpa [#allocation4], 1
    %s806 = scalar_lea.sflag [#allocation4], 1
    %807 = vsyncpa %s806, 1

</llo_original>
